<compile_context>
chip_gen: v7x
topology: tpu7x:2x2x1
jax: 0.10.0
libtpu: 0.0.40
codegen_flags: <defaults>
</compile_context>

<pallas_src>
import jax
import jax.numpy as jnp
from jax.experimental import pallas as pl
from jax.experimental.pallas import tpu as pltpu

LOG_STD_MAX = 2.0
LOG_STD_MIN = -5.0


def actor_kernel(x_ref, w1_ref, b1_ref, w2_ref, b2_ref, wh_ref, bh_ref, wac_ref, out_ref):
    obs = w1_ref.shape[0]          # static: trunk input width
    a2 = wh_ref.shape[1]           # static: 2 * action_dim
    a = a2 // 2
    bf = jnp.bfloat16

    xv = x_ref[...]                      # (TB, OBS+CTX) f32, single load
    xo = xv[:, :obs].astype(bf)          # static lane slices (no wrapper slicing)
    ctx = xv[:, obs:].astype(bf)

    # trunk: Linear -> ReLU -> Linear   (actor_act_at_end=False -> no final activation)
    h1 = jnp.dot(xo, w1_ref[...], preferred_element_type=jnp.float32) + b1_ref[...]
    h1 = jnp.maximum(h1, 0.0)
    h2 = jnp.dot(h1.astype(bf), w2_ref[...], preferred_element_type=jnp.float32) + b2_ref[...]

    # fused heads: cols [:A] = mean (main + adapter-x folded into wh; adapter-ctx added
    # via the zero-padded wac), cols [A:] = log_std pre-squash.
    heads = (jnp.dot(h2.astype(bf), wh_ref[...], preferred_element_type=jnp.float32)
             + jnp.dot(ctx, wac_ref[...], preferred_element_type=jnp.float32)
             + bh_ref[...])

    # tanh/affine squash on the whole slab (EUP), then select mean columns back (VPU).
    squashed = LOG_STD_MIN + 0.5 * (LOG_STD_MAX - LOG_STD_MIN) * (jnp.tanh(heads) + 1.0)
    col = jax.lax.broadcasted_iota(jnp.int32, heads.shape, 1)
    out_ref[...] = jnp.where(col < a, heads, squashed)


def actor_forward(x, packed_params, context_dim, *, batch_tile=None):
    """x: [B, obs_dim_total]; last `context_dim` columns are the context.

    Returns (mean, log_std), each [B, action_dim].
    """
    B, F = x.shape
    w1, b1, w2, b2, wh, bh, wac = packed_params
    OBS = w1.shape[0]
    assert F == OBS + context_dim
    H1, H2 = w1.shape[1], w2.shape[1]
    A2 = wh.shape[1]
    A = A2 // 2

    # MXU-friendly batch tiling; >=2 grid steps for large batches (v7x megacore).
    if batch_tile is not None:
        TB = batch_tile
    elif B % 256 == 0 and B >= 512:
        TB = 256
    elif B % 128 == 0 and B >= 256:
        TB = 128
    else:
        TB = B
    assert B % TB == 0 and (TB == B or TB % 8 == 0)

    def row_spec(nf):
        return pl.BlockSpec((TB, nf), lambda i: (i, 0))

    def full_spec(arr):
        return pl.BlockSpec(arr.shape, lambda i: (0,) * arr.ndim)

    cost = pl.CostEstimate(
        flops=2 * B * (OBS * H1 + H1 * H2 + H2 * A2 + context_dim * A2),
        transcendentals=B * A2,
        bytes_accessed=int(x.size * x.dtype.itemsize
                           + sum(int(p.size) * p.dtype.itemsize for p in packed_params)
                           + B * A2 * 4),
    )

    out = pl.pallas_call(
        actor_kernel,
        out_shape=jax.ShapeDtypeStruct((B, A2), jnp.float32),
        grid=(B // TB,),
        in_specs=[
            row_spec(F),                    # x (whole; split inside kernel)
            full_spec(w1), full_spec(b1),
            full_spec(w2), full_spec(b2),
            full_spec(wh), full_spec(bh),
            full_spec(wac),
        ],
        out_specs=row_spec(A2),             # single lane-contiguous output slab
        compiler_params=pltpu.CompilerParams(dimension_semantics=("parallel",)),
        cost_estimate=cost,
    )(x, w1, b1, w2, b2, wh, bh, wac)

    return out[:, :A], out[:, A:]


def init_params(key, obs_dim, ctx_dim, net_arch, action_dim, disable_adapter=False):
    """Raw f32 params, PyTorch-style init U(-1/sqrt(fan_in), ...); weights are [in, out]."""
    keys = jax.random.split(key, 10)
    ki = iter(range(10))

    def lin(kw, kb, fin, fout):
        bound = 1.0 / jnp.sqrt(jnp.float32(fin))
        w = jax.random.uniform(kw, (fin, fout), jnp.float32, -bound, bound)
        b = jax.random.uniform(kb, (1, fout), jnp.float32, -bound, bound)
        return w, b

    H1, H2 = net_arch
    w1, b1 = lin(keys[next(ki)], keys[next(ki)], obs_dim, H1)
    w2, b2 = lin(keys[next(ki)], keys[next(ki)], H1, H2)
    wm, bm = lin(keys[next(ki)], keys[next(ki)], H2, action_dim)
    # adapter linear over concat([x, ctx]) -> split into x-part and ctx-part
    wa_full, ba = lin(keys[next(ki)], keys[next(ki)], H2 + ctx_dim, action_dim)
    wax, wac = wa_full[:H2], wa_full[H2:]
    wl, bl = lin(keys[next(ki)], keys[next(ki)], H2, action_dim)

    if disable_adapter:
        wax = jnp.zeros_like(wax)
        wac = jnp.zeros_like(wac)
        ba = jnp.zeros_like(ba)

    return (w1, b1, w2, b2, wm, bm, wax, wac, ba, wl, bl)


def pack_params(raw):
    """Fuse adapter-x into the main head, concat mean/logstd heads, cast weights to bf16."""
    (w1, b1, w2, b2, wm, bm, wax, wac, ba, wl, bl) = raw
    A = wm.shape[1]
    CTX = wac.shape[0]
    wm_fused = wm + wax                      # exact algebraic fusion
    bm_fused = bm + ba
    wh = jnp.concatenate([wm_fused, wl], axis=1)          # [H2, 2A]
    bh = jnp.concatenate([bm_fused, bl], axis=1)          # [1, 2A]
    wac_pad = jnp.concatenate([wac, jnp.zeros((CTX, A), wac.dtype)], axis=1)  # [CTX, 2A]
    bf = jnp.bfloat16
    return (w1.astype(bf), b1, w2.astype(bf), b2, wh.astype(bf), bh, wac_pad.astype(bf))


def reference_forward(x, raw, context_dim):
    """Pure-f32 JAX reference matching the PyTorch module semantics."""
    (w1, b1, w2, b2, wm, bm, wax, wac, ba, wl, bl) = raw
    xo = x[:, :-context_dim]
    ctx = x[:, -context_dim:]
    h1 = jnp.maximum(xo @ w1 + b1, 0.0)
    h2 = h1 @ w2 + b2
    mean = (h2 @ wm + bm) + (h2 @ wax + ctx @ wac + ba)
    ls = jnp.tanh(h2 @ wl + bl)
    log_std = LOG_STD_MIN + 0.5 * (LOG_STD_MAX - LOG_STD_MIN) * (ls + 1.0)
    return mean, log_std


if __name__ == "__main__":
    key = jax.random.PRNGKey(0)
    k_in, k_par = jax.random.split(key)

    B = 8              # batch
    CTX = 4            # context_dim
    OBS = 16           # observation dims fed to the trunk (obs_space minus context)
    NET_ARCH = [256, 256]
    A = 6              # action dim

    x = jax.random.normal(k_in, (B, OBS + CTX), jnp.float32)
    raw = init_params(k_par, OBS, CTX, NET_ARCH, A, disable_adapter=False)
    packed = pack_params(raw)

    mean, log_std = actor_forward(x, packed, context_dim=CTX)
    jax.block_until_ready((mean, log_std))

    ref_mean, ref_log_std = reference_forward(x, raw, CTX)
    # bf16 weight streaming vs. pure-f32 reference -> slightly loosened tolerance.
    assert jnp.allclose(mean, ref_mean, atol=3e-2, rtol=3e-2), \
        float(jnp.max(jnp.abs(mean - ref_mean)))
    assert jnp.allclose(log_std, ref_log_std, atol=3e-2, rtol=3e-2), \
        float(jnp.max(jnp.abs(log_std - ref_log_std)))

    print("KERNEL_OK")
</pallas_src>

<mosaic_0001>
module attributes {stable_mosaic.version = 11 : i64} {
  func.func @actor_kernel(%arg0: i32, %arg1: memref<8x20xf32, #tpu.memory_space<vmem>>, %arg2: memref<16x256xbf16, #tpu.memory_space<vmem>>, %arg3: memref<1x256xf32, #tpu.memory_space<vmem>>, %arg4: memref<256x256xbf16, #tpu.memory_space<vmem>>, %arg5: memref<1x256xf32, #tpu.memory_space<vmem>>, %arg6: memref<256x12xbf16, #tpu.memory_space<vmem>>, %arg7: memref<1x12xf32, #tpu.memory_space<vmem>>, %arg8: memref<4x12xbf16, #tpu.memory_space<vmem>>, %arg9: memref<8x12xf32, #tpu.memory_space<vmem>>) attributes {dimension_semantics = [#tpu.dimension_semantics<parallel>], iteration_bounds = array<i64: 1>, scalar_prefetch = 0 : i64, scratch_operands = 0 : i64, tpu.core_type = #tpu.core_type<tc>, window_params = [{transform_indices = @transform_0, window_bounds = array<i64: 8, 20>}, {pipeline_mode = #tpu.pipeline_mode<synchronous>, transform_indices = @transform_1, window_bounds = array<i64: 16, 256>}, {pipeline_mode = #tpu.pipeline_mode<synchronous>, transform_indices = @transform_2, window_bounds = array<i64: 1, 256>}, {pipeline_mode = #tpu.pipeline_mode<synchronous>, transform_indices = @transform_3, window_bounds = array<i64: 256, 256>}, {pipeline_mode = #tpu.pipeline_mode<synchronous>, transform_indices = @transform_4, window_bounds = array<i64: 1, 256>}, {pipeline_mode = #tpu.pipeline_mode<synchronous>, transform_indices = @transform_5, window_bounds = array<i64: 256, 12>}, {pipeline_mode = #tpu.pipeline_mode<synchronous>, transform_indices = @transform_6, window_bounds = array<i64: 1, 12>}, {pipeline_mode = #tpu.pipeline_mode<synchronous>, transform_indices = @transform_7, window_bounds = array<i64: 4, 12>}, {transform_indices = @transform_8, window_bounds = array<i64: 8, 12>}]} {
    %c0 = arith.constant 0 : index
    %c0_0 = arith.constant 0 : index
    %0 = vector.load %arg1[%c0, %c0_0] : memref<8x20xf32, #tpu.memory_space<vmem>>, vector<8x20xf32>
    %1 = vector.extract_strided_slice %0 {offsets = [0, 0], sizes = [8, 16], strides = [1, 1]} : vector<8x20xf32> to vector<8x16xf32>
    %2 = arith.truncf %1 : vector<8x16xf32> to vector<8x16xbf16>
    %3 = vector.extract_strided_slice %0 {offsets = [0, 16], sizes = [8, 4], strides = [1, 1]} : vector<8x20xf32> to vector<8x4xf32>
    %4 = arith.truncf %3 : vector<8x4xf32> to vector<8x4xbf16>
    %c0_1 = arith.constant 0 : index
    %c0_2 = arith.constant 0 : index
    %5 = vector.load %arg2[%c0_1, %c0_2] : memref<16x256xbf16, #tpu.memory_space<vmem>>, vector<16x256xbf16>
    %cst = arith.constant dense<0.000000e+00> : vector<8x256xf32>
    %6 = tpu.matmul %2, %5, %cst {dimension_numbers = #tpu.dot_dimension_numbers<[1], [0], [0], [1], [0, 0, 1, 1], [], []>} : vector<8x16xbf16>, vector<16x256xbf16>, vector<8x256xf32> -> vector<8x256xf32>
    %c0_3 = arith.constant 0 : index
    %c0_4 = arith.constant 0 : index
    %7 = vector.load %arg3[%c0_3, %c0_4] : memref<1x256xf32, #tpu.memory_space<vmem>>, vector<1x256xf32>
    %8 = vector.broadcast %7 : vector<1x256xf32> to vector<8x256xf32>
    %9 = arith.addf %6, %8 : vector<8x256xf32>
    %cst_5 = arith.constant 0.000000e+00 : f32
    %10 = vector.broadcast %cst_5 : f32 to vector<8x256xf32>
    %11 = arith.maximumf %9, %10 : vector<8x256xf32>
    %12 = arith.truncf %11 : vector<8x256xf32> to vector<8x256xbf16>
    %c0_6 = arith.constant 0 : index
    %c0_7 = arith.constant 0 : index
    %13 = vector.load %arg4[%c0_6, %c0_7] : memref<256x256xbf16, #tpu.memory_space<vmem>>, vector<256x256xbf16>
    %cst_8 = arith.constant dense<0.000000e+00> : vector<8x256xf32>
    %14 = tpu.matmul %12, %13, %cst_8 {dimension_numbers = #tpu.dot_dimension_numbers<[1], [0], [0], [1], [0, 0, 1, 1], [], []>} : vector<8x256xbf16>, vector<256x256xbf16>, vector<8x256xf32> -> vector<8x256xf32>
    %c0_9 = arith.constant 0 : index
    %c0_10 = arith.constant 0 : index
    %15 = vector.load %arg5[%c0_9, %c0_10] : memref<1x256xf32, #tpu.memory_space<vmem>>, vector<1x256xf32>
    %16 = vector.broadcast %15 : vector<1x256xf32> to vector<8x256xf32>
    %17 = arith.addf %14, %16 : vector<8x256xf32>
    %18 = arith.truncf %17 : vector<8x256xf32> to vector<8x256xbf16>
    %c0_11 = arith.constant 0 : index
    %c0_12 = arith.constant 0 : index
    %19 = vector.load %arg6[%c0_11, %c0_12] : memref<256x12xbf16, #tpu.memory_space<vmem>>, vector<256x12xbf16>
    %cst_13 = arith.constant dense<0.000000e+00> : vector<8x12xf32>
    %20 = tpu.matmul %18, %19, %cst_13 {dimension_numbers = #tpu.dot_dimension_numbers<[1], [0], [0], [1], [0, 0, 1, 1], [], []>} : vector<8x256xbf16>, vector<256x12xbf16>, vector<8x12xf32> -> vector<8x12xf32>
    %c0_14 = arith.constant 0 : index
    %c0_15 = arith.constant 0 : index
    %21 = vector.load %arg8[%c0_14, %c0_15] : memref<4x12xbf16, #tpu.memory_space<vmem>>, vector<4x12xbf16>
    %cst_16 = arith.constant dense<0.000000e+00> : vector<8x12xf32>
    %22 = tpu.matmul %4, %21, %cst_16 {dimension_numbers = #tpu.dot_dimension_numbers<[1], [0], [0], [1], [0, 0, 1, 1], [], []>} : vector<8x4xbf16>, vector<4x12xbf16>, vector<8x12xf32> -> vector<8x12xf32>
    %23 = arith.addf %20, %22 : vector<8x12xf32>
    %c0_17 = arith.constant 0 : index
    %c0_18 = arith.constant 0 : index
    %24 = vector.load %arg7[%c0_17, %c0_18] : memref<1x12xf32, #tpu.memory_space<vmem>>, vector<1x12xf32>
    %25 = vector.broadcast %24 : vector<1x12xf32> to vector<8x12xf32>
    %26 = arith.addf %23, %25 : vector<8x12xf32>
    %27 = math.tanh %26 : vector<8x12xf32>
    %cst_19 = arith.constant 1.000000e+00 : f32
    %28 = vector.broadcast %cst_19 : f32 to vector<8x12xf32>
    %29 = arith.addf %27, %28 : vector<8x12xf32>
    %cst_20 = arith.constant 3.500000e+00 : f32
    %30 = vector.broadcast %cst_20 : f32 to vector<8x12xf32>
    %31 = arith.mulf %30, %29 : vector<8x12xf32>
    %cst_21 = arith.constant -5.000000e+00 : f32
    %32 = vector.broadcast %cst_21 : f32 to vector<8x12xf32>
    %33 = arith.addf %32, %31 : vector<8x12xf32>
    %34 = tpu.iota {dimensions = array<i32: 1>} : vector<8x12xi32>
    %c6_i32 = arith.constant 6 : i32
    %35 = vector.broadcast %c6_i32 : i32 to vector<8x12xi32>
    %36 = arith.cmpi slt, %34, %35 : vector<8x12xi32>
    %37 = arith.select %36, %26, %33 : vector<8x12xi1>, vector<8x12xf32>
    %c0_22 = arith.constant 0 : index
    %c0_23 = arith.constant 0 : index
    %38 = vector.load %arg9[%c0_22, %c0_23] : memref<8x12xf32, #tpu.memory_space<vmem>>, vector<8x12xf32>
    tpu.vector_store %arg9[%c0_22, %c0_23], %37 {strides = array<i32>} : memref<8x12xf32, #tpu.memory_space<vmem>>, vector<8x12xf32>,
    return
  }
  func.func @transform_0(%arg0: i32) -> (i32, i32) {
    %c0_i32 = arith.constant 0 : i32
    %c0_i32_0 = arith.constant 0 : i32
    return %arg0, %c0_i32 : i32, i32
  }
  func.func @transform_1(%arg0: i32) -> (i32, i32) {
    %c0_i32 = arith.constant 0 : i32
    %c0_i32_0 = arith.constant 0 : i32
    %c0_i32_1 = arith.constant 0 : i32
    return %c0_i32, %c0_i32_0 : i32, i32
  }
  func.func @transform_2(%arg0: i32) -> (i32, i32) {
    %c0_i32 = arith.constant 0 : i32
    %c0_i32_0 = arith.constant 0 : i32
    %c0_i32_1 = arith.constant 0 : i32
    return %c0_i32, %c0_i32_0 : i32, i32
  }
  func.func @transform_3(%arg0: i32) -> (i32, i32) {
    %c0_i32 = arith.constant 0 : i32
    %c0_i32_0 = arith.constant 0 : i32
    %c0_i32_1 = arith.constant 0 : i32
    return %c0_i32, %c0_i32_0 : i32, i32
  }
  func.func @transform_4(%arg0: i32) -> (i32, i32) {
    %c0_i32 = arith.constant 0 : i32
    %c0_i32_0 = arith.constant 0 : i32
    %c0_i32_1 = arith.constant 0 : i32
    return %c0_i32, %c0_i32_0 : i32, i32
  }
  func.func @transform_5(%arg0: i32) -> (i32, i32) {
    %c0_i32 = arith.constant 0 : i32
    %c0_i32_0 = arith.constant 0 : i32
    %c0_i32_1 = arith.constant 0 : i32
    return %c0_i32, %c0_i32_0 : i32, i32
  }
  func.func @transform_6(%arg0: i32) -> (i32, i32) {
    %c0_i32 = arith.constant 0 : i32
    %c0_i32_0 = arith.constant 0 : i32
    %c0_i32_1 = arith.constant 0 : i32
    return %c0_i32, %c0_i32_0 : i32, i32
  }
  func.func @transform_7(%arg0: i32) -> (i32, i32) {
    %c0_i32 = arith.constant 0 : i32
    %c0_i32_0 = arith.constant 0 : i32
    %c0_i32_1 = arith.constant 0 : i32
    return %c0_i32, %c0_i32_0 : i32, i32
  }
  func.func @transform_8(%arg0: i32) -> (i32, i32) {
    %c0_i32 = arith.constant 0 : i32
    %c0_i32_0 = arith.constant 0 : i32
    return %arg0, %c0_i32 : i32, i32
  }
}

</mosaic_0001>

<llo_original>
// kernel: tpu_custom_call.1
$region0: #{tpu_custom_call.1}
  #allocation0 [shape = 'u32[]', space=smem, size = 0x4, offset = 0x4, fixed_abs, tag = 'smem constant byte address 0x4 - core index']
  #allocation1 [shape = 'u32[144,128]{1,0:T(1,128)}', space=vmem, size = 0x12000, scoped, tag = 'internal scratch']
  %s0 = inlined_call_operand.vmem [shape: f32[8,20], index: 0, kind: input, shape index: {}]
  %s1 = inlined_call_operand.vmem [shape: bf16[16,256], index: 1, kind: input, shape index: {}]
  %s2 = inlined_call_operand.vmem [shape: f32[1,256], index: 2, kind: input, shape index: {}]
  %s3 = inlined_call_operand.hbm [shape: bf16[256,256], index: 3, kind: input, shape index: {}]
  %s4 = inlined_call_operand.vmem [shape: f32[1,256], index: 4, kind: input, shape index: {}]
  %s5 = inlined_call_operand.vmem [shape: bf16[256,12], index: 5, kind: input, shape index: {}]
  %s6 = inlined_call_operand.vmem [shape: f32[1,12], index: 6, kind: input, shape index: {}]
  %s7 = inlined_call_operand.vmem [shape: bf16[4,12], index: 7, kind: input, shape index: {}]
  %s8 = inlined_call_operand.hbm [shape: f32[8,12], index: 8, kind: output, shape index: {}]
  %s9 = sld [smem:[#allocation0]]
  $region46: #{tpu_custom_call.1} parent=0
    _
  %s11 = ssub.s32 1, %s9
  %s12 = scalar_select 0, %s11, %s9
  $region1: #{tpu_custom_call.1} parent=0
    #allocation2 [shape = 'u8[131072]{0}', space=vmem, size = 0x20000, scoped, tag = 'input window, operand 3, single buffered']
    #allocation3 [shape = 's32[1]{0}', space=sflag, size = 0x4, scoped, tag = 'scoped memory for tpu_custom_call.1']
    #allocation4 [shape = 's32[1]{0}', space=sflag, size = 0x4, scoped, tag = 'scoped memory for tpu_custom_call.1']
    #allocation5 [shape = 'u8[4096]{0}', space=vmem, size = 0x1000, scoped, tag = 'output window, operand 0, single buffered']
    %13 = vsyncpa [#allocation3], 0
    %14 = vsyncpa [#allocation4], 0
    // Predicated region
    $region2: #{tpu_custom_call.1} parent=1 // pred_check
      _
    $region3: #{tpu_custom_call.1} parent=1 // pred_check_branch
      %16 = sbr.rel (0) target = $region5
    $region4: #{tpu_custom_call.1} parent=1 // pred_region
      _
    $region5: #{tpu_custom_call.1} parent=1 // pred_fallthru
      _
    // Predicated region
    $region6: #{tpu_custom_call.1} parent=1 // pred_check
      _
    $region7: #{tpu_custom_call.1} parent=1 // pred_check_branch
      %18 = sbr.rel (0) target = $region9
    $region8: #{tpu_custom_call.1} parent=1 // pred_region
      _
    $region9: #{tpu_custom_call.1} parent=1 // pred_fallthru
      _
    // Predicated region
    $region10: #{tpu_custom_call.1} parent=1 // pred_check
      _
    $region11: #{tpu_custom_call.1} parent=1 // pred_check_branch
      %20 = sbr.rel (0) target = $region13
    $region12: #{tpu_custom_call.1} parent=1 // pred_region
      _
    $region13: #{tpu_custom_call.1} parent=1 // pred_fallthru
      _
    // Predicated region
    $region14: #{tpu_custom_call.1} parent=1 // pred_check
      _
    $region15: #{tpu_custom_call.1} parent=1 // pred_check_branch
      %22 = sbr.rel (0) target = $region17
    $region16: #{tpu_custom_call.1} parent=1 // pred_region
      %s24 = ssub.s32 4096, 4096
      %25 = vsyncadd [#allocation3], %s24
      %s26 = sshll.u32 [#allocation2], 4
      %s27 = int_to_ptr.vmem [resolvable:$true] %s26
      %32 = dma.hbm_to_vmem [thread:$0]  %s3, 4096, %s27, [#allocation3], 128, 128, 8
    $region17: #{tpu_custom_call.1} parent=1 // pred_fallthru
      _
    // Predicated region
    $region18: #{tpu_custom_call.1} parent=1 // pred_check
      _
    $region19: #{tpu_custom_call.1} parent=1 // pred_check_branch
      %34 = sbr.rel (0) target = $region21
    $region20: #{tpu_custom_call.1} parent=1 // pred_region
      _
    $region21: #{tpu_custom_call.1} parent=1 // pred_fallthru
      _
    // Predicated region
    $region22: #{tpu_custom_call.1} parent=1 // pred_check
      _
    $region23: #{tpu_custom_call.1} parent=1 // pred_check_branch
      %36 = sbr.rel (0) target = $region25
    $region24: #{tpu_custom_call.1} parent=1 // pred_region
      _
    $region25: #{tpu_custom_call.1} parent=1 // pred_fallthru
      _
    // Predicated region
    $region26: #{tpu_custom_call.1} parent=1 // pred_check
      _
    $region27: #{tpu_custom_call.1} parent=1 // pred_check_branch
      %38 = sbr.rel (0) target = $region29
    $region28: #{tpu_custom_call.1} parent=1 // pred_region
      _
    $region29: #{tpu_custom_call.1} parent=1 // pred_fallthru
      _
    // Predicated region
    $region30: #{tpu_custom_call.1} parent=1 // pred_check
      _
    $region31: #{tpu_custom_call.1} parent=1 // pred_check_branch
      %40 = sbr.rel (0) target = $region33
    $region32: #{tpu_custom_call.1} parent=1 // pred_region
      _
    $region33: #{tpu_custom_call.1} parent=1 // pred_fallthru
      _
    // Predicated region
    $region34: #{tpu_custom_call.1} parent=1 // pred_check
      _
    $region35: #{tpu_custom_call.1} parent=1 // pred_check_branch
      %42 = sbr.rel (0) target = $region37
    $region36: #{tpu_custom_call.1} parent=1 // pred_region
      %43 = dma.done [#allocation3], 4096
    $region37: #{tpu_custom_call.1} parent=1 // pred_fallthru
      _
    %v45 = vld [vmem:[%s0] sm:$0xff]
    %v46 = vpack.c.bf16 %v45, %v45
    %v47 = vld [vmem:[%s1] sm:$0xff]
    %v48 = vld [vmem:[%s1 + $0x8] sm:$0xff]
    %v49 = vld [vmem:[%s2] sm:$0x3]
    %v51 = vlaneseq
    %v52 = vshrl.u32 %v51, 7
    %v53 = vsub.s32 0, %v52
    %v54 = vrot.slane %v49, %v53
    %v55 = vlaneseq
    %v56 = vshrl.u32 %v55, 7
    %v57 = vsub.s32 1, %v56
    %v58 = vrot.slane %v49, %v57
    %v63 = vunpack.c.l.b16 %v47
    %v64 = vunpack.c.h.b16 %v47
    %v65 = vunpack.c.l.b16 %v48
    %v66 = vunpack.c.h.b16 %v48
    %v67 = vpack.c.b16 %v65, %v63
    %v68 = vpack.c.b16 %v66, %v64
    %vm71 = vcmask 130048
    %v73 = vsel %vm71, %v46, 0
    %75 = vmatprep.subr.bf16.mxu0 %v68
    %76 = vmatpush1.bf16.msra.mxu0 %v67
    %77 = vmatprep.subr.bf16.mxu0 0
    %78 = vmatpush1.bf16.msra.mxu0 0
    %79 = vmatprep.subr.bf16.mxu0 0
    %80 = vmatpush1.bf16.msra.mxu0 0
    %81 = vmatprep.subr.bf16.mxu0 0
    %82 = vmatpush1.bf16.msra.mxu0 0
    %83 = vmatprep.subr.bf16.mxu0 0
    %84 = vmatpush1.bf16.msra.mxu0 0
    %85 = vmatprep.subr.bf16.mxu0 0
    %86 = vmatpush1.bf16.msra.mxu0 0
    %87 = vmatprep.subr.bf16.mxu0 0
    %88 = vmatpush1.bf16.msra.mxu0 0
    %89 = vmatprep.subr.bf16.mxu0 0
    %90 = vmatpush1.bf16.msra.mxu0 0
    %91 = vmatprep.subr.bf16.mxu0 0
    %92 = vmatpush1.bf16.msra.mxu0 0
    %93 = vmatprep.subr.bf16.mxu0 0
    %94 = vmatpush1.bf16.msra.mxu0 0
    %95 = vmatprep.subr.bf16.mxu0 0
    %96 = vmatpush1.bf16.msra.mxu0 0
    %97 = vmatprep.subr.bf16.mxu0 0
    %98 = vmatpush1.bf16.msra.mxu0 0
    %99 = vmatprep.subr.bf16.mxu0 0
    %100 = vmatpush1.bf16.msra.mxu0 0
    %101 = vmatprep.subr.bf16.mxu0 0
    %102 = vmatpush1.bf16.msra.mxu0 0
    %103 = vmatprep.subr.bf16.mxu0 0
    %104 = vmatpush1.bf16.msra.mxu0 0
    %105 = vmatprep.subr.bf16.mxu0 0
    %106 = vmatpush1.bf16.msra.mxu0 0
    %107 = vmatprep.mubr.bf16.mxu0 0
    %108 = vmatmul.mubr.bf16.gmra.mrb[0].mxu0 %v73
    %v109 = vpop.f32.mrb[0].mxu0
    %v110 = vadd.f32 %v54, %v109
    %v111 = vpop.f32.mrb[0].mxu0
    %v112 = vadd.f32 %v58, %v111
    %v113 = vpop.f32.mrb[0].mxu0
    %v114 = vpop.f32.mrb[0].mxu0
    %115 = vdwg.mxu0
    %v116 = vmax.f32 %v110, 0.0
    %v117 = vmax.f32 %v112, 0.0
    %v118 = vpack.c.bf16 %v116, %v116
    %v119 = vpack.c.bf16 %v117, %v117
    %v120 = vld [vmem:[#allocation2] sm:$0xff]
    %v121 = vld [vmem:[#allocation2 + $0x8] sm:$0xff]
    %v122 = vld [vmem:[#allocation2 + $0x10] sm:$0xff]
    %v123 = vld [vmem:[#allocation2 + $0x18] sm:$0xff]
    %v124 = vld [vmem:[#allocation2 + $0x20] sm:$0xff]
    %v125 = vld [vmem:[#allocation2 + $0x28] sm:$0xff]
    %v126 = vld [vmem:[#allocation2 + $0x30] sm:$0xff]
    %v127 = vld [vmem:[#allocation2 + $0x38] sm:$0xff]
    %v128 = vld [vmem:[#allocation2 + $0x40] sm:$0xff]
    %v129 = vld [vmem:[#allocation2 + $0x48] sm:$0xff]
    %v130 = vld [vmem:[#allocation2 + $0x50] sm:$0xff]
    %v131 = vld [vmem:[#allocation2 + $0x58] sm:$0xff]
    %v132 = vld [vmem:[#allocation2 + $0x60] sm:$0xff]
    %v133 = vld [vmem:[#allocation2 + $0x68] sm:$0xff]
    %v134 = vld [vmem:[#allocation2 + $0x70] sm:$0xff]
    %v135 = vld [vmem:[#allocation2 + $0x78] sm:$0xff]
    %v136 = vld [vmem:[#allocation2 + $0x80] sm:$0xff]
    %v137 = vld [vmem:[#allocation2 + $0x88] sm:$0xff]
    %v138 = vld [vmem:[#allocation2 + $0x90] sm:$0xff]
    %v139 = vld [vmem:[#allocation2 + $0x98] sm:$0xff]
    %v140 = vld [vmem:[#allocation2 + $0xa0] sm:$0xff]
    %v141 = vld [vmem:[#allocation2 + $0xa8] sm:$0xff]
    %v142 = vld [vmem:[#allocation2 + $0xb0] sm:$0xff]
    %v143 = vld [vmem:[#allocation2 + $0xb8] sm:$0xff]
    %v144 = vld [vmem:[#allocation2 + $0xc0] sm:$0xff]
    %v145 = vld [vmem:[#allocation2 + $0xc8] sm:$0xff]
    %v146 = vld [vmem:[#allocation2 + $0xd0] sm:$0xff]
    %v147 = vld [vmem:[#allocation2 + $0xd8] sm:$0xff]
    %v148 = vld [vmem:[#allocation2 + $0xe0] sm:$0xff]
    %v149 = vld [vmem:[#allocation2 + $0xe8] sm:$0xff]
    %v150 = vld [vmem:[#allocation2 + $0xf0] sm:$0xff]
    %v151 = vld [vmem:[#allocation2 + $0xf8] sm:$0xff]
    %v152 = vld [vmem:[%s4] sm:$0x3]
    %v154 = vlaneseq
    %v155 = vshrl.u32 %v154, 7
    %v156 = vsub.s32 0, %v155
    %v157 = vrot.slane %v152, %v156
    %v158 = vlaneseq
    %v159 = vshrl.u32 %v158, 7
    %v160 = vsub.s32 1, %v159
    %v161 = vrot.slane %v152, %v160
    %v196 = vunpack.c.l.b16 %v120
    %v197 = vunpack.c.h.b16 %v120
    %v198 = vunpack.c.l.b16 %v121
    %v199 = vunpack.c.h.b16 %v121
    %v200 = vunpack.c.l.b16 %v122
    %v201 = vunpack.c.h.b16 %v122
    %v202 = vunpack.c.l.b16 %v123
    %v203 = vunpack.c.h.b16 %v123
    %v204 = vunpack.c.l.b16 %v124
    %v205 = vunpack.c.h.b16 %v124
    %v206 = vunpack.c.l.b16 %v125
    %v207 = vunpack.c.h.b16 %v125
    %v208 = vunpack.c.l.b16 %v126
    %v209 = vunpack.c.h.b16 %v126
    %v210 = vunpack.c.l.b16 %v127
    %v211 = vunpack.c.h.b16 %v127
    %v212 = vunpack.c.l.b16 %v128
    %v213 = vunpack.c.h.b16 %v128
    %v214 = vunpack.c.l.b16 %v129
    %v215 = vunpack.c.h.b16 %v129
    %v216 = vunpack.c.l.b16 %v130
    %v217 = vunpack.c.h.b16 %v130
    %v218 = vunpack.c.l.b16 %v131
    %v219 = vunpack.c.h.b16 %v131
    %v220 = vunpack.c.l.b16 %v132
    %v221 = vunpack.c.h.b16 %v132
    %v222 = vunpack.c.l.b16 %v133
    %v223 = vunpack.c.h.b16 %v133
    %v224 = vunpack.c.l.b16 %v134
    %v225 = vunpack.c.h.b16 %v134
    %v226 = vunpack.c.l.b16 %v135
    %v227 = vunpack.c.h.b16 %v135
    %v228 = vunpack.c.l.b16 %v136
    %v229 = vunpack.c.h.b16 %v136
    %v230 = vunpack.c.l.b16 %v137
    %v231 = vunpack.c.h.b16 %v137
    %v232 = vunpack.c.l.b16 %v138
    %v233 = vunpack.c.h.b16 %v138
    %v234 = vunpack.c.l.b16 %v139
    %v235 = vunpack.c.h.b16 %v139
    %v236 = vunpack.c.l.b16 %v140
    %v237 = vunpack.c.h.b16 %v140
    %v238 = vunpack.c.l.b16 %v141
    %v239 = vunpack.c.h.b16 %v141
    %v240 = vunpack.c.l.b16 %v142
    %v241 = vunpack.c.h.b16 %v142
    %v242 = vunpack.c.l.b16 %v143
    %v243 = vunpack.c.h.b16 %v143
    %v244 = vunpack.c.l.b16 %v144
    %v245 = vunpack.c.h.b16 %v144
    %v246 = vunpack.c.l.b16 %v145
    %v247 = vunpack.c.h.b16 %v145
    %v248 = vunpack.c.l.b16 %v146
    %v249 = vunpack.c.h.b16 %v146
    %v250 = vunpack.c.l.b16 %v147
    %v251 = vunpack.c.h.b16 %v147
    %v252 = vunpack.c.l.b16 %v148
    %v253 = vunpack.c.h.b16 %v148
    %v254 = vunpack.c.l.b16 %v149
    %v255 = vunpack.c.h.b16 %v149
    %v256 = vunpack.c.l.b16 %v150
    %v257 = vunpack.c.h.b16 %v150
    %v258 = vunpack.c.l.b16 %v151
    %v259 = vunpack.c.h.b16 %v151
    %v260 = vpack.c.b16 %v198, %v196
    %v261 = vpack.c.b16 %v199, %v197
    %v262 = vpack.c.b16 %v202, %v200
    %v263 = vpack.c.b16 %v203, %v201
    %v264 = vpack.c.b16 %v206, %v204
    %v265 = vpack.c.b16 %v207, %v205
    %v266 = vpack.c.b16 %v210, %v208
    %v267 = vpack.c.b16 %v211, %v209
    %v268 = vpack.c.b16 %v214, %v212
    %v269 = vpack.c.b16 %v215, %v213
    %v270 = vpack.c.b16 %v218, %v216
    %v271 = vpack.c.b16 %v219, %v217
    %v272 = vpack.c.b16 %v222, %v220
    %v273 = vpack.c.b16 %v223, %v221
    %v274 = vpack.c.b16 %v226, %v224
    %v275 = vpack.c.b16 %v227, %v225
    %v276 = vpack.c.b16 %v230, %v228
    %v277 = vpack.c.b16 %v231, %v229
    %v278 = vpack.c.b16 %v234, %v232
    %v279 = vpack.c.b16 %v235, %v233
    %v280 = vpack.c.b16 %v238, %v236
    %v281 = vpack.c.b16 %v239, %v237
    %v282 = vpack.c.b16 %v242, %v240
    %v283 = vpack.c.b16 %v243, %v241
    %v284 = vpack.c.b16 %v246, %v244
    %v285 = vpack.c.b16 %v247, %v245
    %v286 = vpack.c.b16 %v250, %v248
    %v287 = vpack.c.b16 %v251, %v249
    %v288 = vpack.c.b16 %v254, %v252
    %v289 = vpack.c.b16 %v255, %v253
    %v290 = vpack.c.b16 %v258, %v256
    %v291 = vpack.c.b16 %v259, %v257
    %324 = vmatprep.subr.bf16.mxu0 %v261
    %325 = vmatpush1.bf16.msra.mxu0 %v260
    %326 = vmatprep.subr.bf16.mxu0 %v263
    %327 = vmatpush1.bf16.msra.mxu0 %v262
    %328 = vmatprep.subr.bf16.mxu0 %v265
    %329 = vmatpush1.bf16.msra.mxu0 %v264
    %330 = vmatprep.subr.bf16.mxu0 %v267
    %331 = vmatpush1.bf16.msra.mxu0 %v266
    %332 = vmatprep.subr.bf16.mxu0 %v269
    %333 = vmatpush1.bf16.msra.mxu0 %v268
    %334 = vmatprep.subr.bf16.mxu0 %v271
    %335 = vmatpush1.bf16.msra.mxu0 %v270
    %336 = vmatprep.subr.bf16.mxu0 %v273
    %337 = vmatpush1.bf16.msra.mxu0 %v272
    %338 = vmatprep.subr.bf16.mxu0 %v275
    %339 = vmatpush1.bf16.msra.mxu0 %v274
    %340 = vmatprep.subr.bf16.mxu0 %v277
    %341 = vmatpush1.bf16.msra.mxu0 %v276
    %342 = vmatprep.subr.bf16.mxu0 %v279
    %343 = vmatpush1.bf16.msra.mxu0 %v278
    %344 = vmatprep.subr.bf16.mxu0 %v281
    %345 = vmatpush1.bf16.msra.mxu0 %v280
    %346 = vmatprep.subr.bf16.mxu0 %v283
    %347 = vmatpush1.bf16.msra.mxu0 %v282
    %348 = vmatprep.subr.bf16.mxu0 %v285
    %349 = vmatpush1.bf16.msra.mxu0 %v284
    %350 = vmatprep.subr.bf16.mxu0 %v287
    %351 = vmatpush1.bf16.msra.mxu0 %v286
    %352 = vmatprep.subr.bf16.mxu0 %v289
    %353 = vmatpush1.bf16.msra.mxu0 %v288
    %354 = vmatprep.subr.bf16.mxu0 %v291
    %355 = vmatpush1.bf16.msra.mxu0 %v290
    %356 = vmatprep.mubr.bf16.mxu0 %v119
    %357 = vmatmul.mubr.bf16.gmra.mrb[0].mxu0 %v118
    %v358 = vpop.f32.mrb[0].mxu0
    %v359 = vadd.f32 %v157, %v358
    %v360 = vpop.f32.mrb[0].mxu0
    %v361 = vadd.f32 %v161, %v360
    %v362 = vpop.f32.mrb[0].mxu0
    %v363 = vpop.f32.mrb[0].mxu0
    %364 = vdwg.mxu0
    %v365 = vpack.c.bf16 %v359, %v359
    %v366 = vpack.c.bf16 %v361, %v361
    %v367 = vld [vmem:[%s5] sm:$0xf]
    %v368 = vld [vmem:[%s5 + $0x4] sm:$0xf]
    %v369 = vld [vmem:[%s5 + $0x8] sm:$0xf]
    %v370 = vld [vmem:[%s5 + $0xc] sm:$0xf]
    %v371 = vld [vmem:[%s5 + $0x10] sm:$0xf]
    %v372 = vld [vmem:[%s5 + $0x14] sm:$0xf]
    %v373 = vld [vmem:[%s5 + $0x18] sm:$0xf]
    %v374 = vld [vmem:[%s5 + $0x1c] sm:$0xf]
    %v375 = vld [vmem:[%s5 + $0x20] sm:$0xf]
    %v376 = vld [vmem:[%s5 + $0x24] sm:$0xf]
    %v377 = vld [vmem:[%s5 + $0x28] sm:$0xf]
    %v378 = vld [vmem:[%s5 + $0x2c] sm:$0xf]
    %v379 = vld [vmem:[%s5 + $0x30] sm:$0xf]
    %v380 = vld [vmem:[%s5 + $0x34] sm:$0xf]
    %v381 = vld [vmem:[%s5 + $0x38] sm:$0xf]
    %v382 = vld [vmem:[%s5 + $0x3c] sm:$0xf]
    %v383 = vld [vmem:[%s5 + $0x40] sm:$0xf]
    %v384 = vld [vmem:[%s5 + $0x44] sm:$0xf]
    %v385 = vld [vmem:[%s5 + $0x48] sm:$0xf]
    %v386 = vld [vmem:[%s5 + $0x4c] sm:$0xf]
    %v387 = vld [vmem:[%s5 + $0x50] sm:$0xf]
    %v388 = vld [vmem:[%s5 + $0x54] sm:$0xf]
    %v389 = vld [vmem:[%s5 + $0x58] sm:$0xf]
    %v390 = vld [vmem:[%s5 + $0x5c] sm:$0xf]
    %v391 = vld [vmem:[%s5 + $0x60] sm:$0xf]
    %v392 = vld [vmem:[%s5 + $0x64] sm:$0xf]
    %v393 = vld [vmem:[%s5 + $0x68] sm:$0xf]
    %v394 = vld [vmem:[%s5 + $0x6c] sm:$0xf]
    %v395 = vld [vmem:[%s5 + $0x70] sm:$0xf]
    %v396 = vld [vmem:[%s5 + $0x74] sm:$0xf]
    %v397 = vld [vmem:[%s5 + $0x78] sm:$0xf]
    %v398 = vld [vmem:[%s5 + $0x7c] sm:$0xf]
    %v399 = vld [vmem:[%s7] sm:$0x3]
    %401 = vrot.lane.b32.xlu0 %v46, 112
    %v402 = vpop.permute.xlu0 %401
    %vm403 = vcmask 31744
    %v405 = vsel %vm403, %v402, 0
    %vm407 = vcmask 1041408
    %v409 = vsel %vm407, %v399, 0
    %411 = vmatprep.subr.bf16.mxu0 0
    %412 = vmatpush1.bf16.msra.mxu0 %v409
    %413 = vmatprep.subr.bf16.mxu0 0
    %414 = vmatpush1.bf16.msra.mxu0 0
    %415 = vmatprep.subr.bf16.mxu0 0
    %416 = vmatpush1.bf16.msra.mxu0 0
    %417 = vmatprep.subr.bf16.mxu0 0
    %418 = vmatpush1.bf16.msra.mxu0 0
    %419 = vmatprep.subr.bf16.mxu0 0
    %420 = vmatpush1.bf16.msra.mxu0 0
    %421 = vmatprep.subr.bf16.mxu0 0
    %422 = vmatpush1.bf16.msra.mxu0 0
    %423 = vmatprep.subr.bf16.mxu0 0
    %424 = vmatpush1.bf16.msra.mxu0 0
    %425 = vmatprep.subr.bf16.mxu0 0
    %426 = vmatpush1.bf16.msra.mxu0 0
    %427 = vmatprep.subr.bf16.mxu0 0
    %428 = vmatpush1.bf16.msra.mxu0 0
    %429 = vmatprep.subr.bf16.mxu0 0
    %430 = vmatpush1.bf16.msra.mxu0 0
    %431 = vmatprep.subr.bf16.mxu0 0
    %432 = vmatpush1.bf16.msra.mxu0 0
    %433 = vmatprep.subr.bf16.mxu0 0
    %434 = vmatpush1.bf16.msra.mxu0 0
    %435 = vmatprep.subr.bf16.mxu0 0
    %436 = vmatpush1.bf16.msra.mxu0 0
    %437 = vmatprep.subr.bf16.mxu0 0
    %438 = vmatpush1.bf16.msra.mxu0 0
    %439 = vmatprep.subr.bf16.mxu0 0
    %440 = vmatpush1.bf16.msra.mxu0 0
    %441 = vmatprep.subr.bf16.mxu0 0
    %442 = vmatpush1.bf16.msra.mxu0 0
    %443 = vmatprep.mubr.bf16.mxu0 0
    %444 = vmatmul.mubr.bf16.gmra.mrb[0].mxu0 %v405
    %v445 = vpop.f32.mrb[0].mxu0
    %v446 = vadd.f32 0.0, %v445
    %v447 = vpop.f32.mrb[0].mxu0
    %v448 = vpop.f32.mrb[0].mxu0
    %v449 = vpop.f32.mrb[0].mxu0
    %450 = vdwg.mxu0
    %v483 = vunpack.c.l.b16 %v367
    %v484 = vunpack.c.l.b16 %v368
    %v485 = vunpack.c.l.b16 %v369
    %v486 = vunpack.c.l.b16 %v370
    %v487 = vunpack.c.l.b16 %v371
    %v488 = vunpack.c.l.b16 %v372
    %v489 = vunpack.c.l.b16 %v373
    %v490 = vunpack.c.l.b16 %v374
    %v491 = vunpack.c.l.b16 %v375
    %v492 = vunpack.c.l.b16 %v376
    %v493 = vunpack.c.l.b16 %v377
    %v494 = vunpack.c.l.b16 %v378
    %v495 = vunpack.c.l.b16 %v379
    %v496 = vunpack.c.l.b16 %v380
    %v497 = vunpack.c.l.b16 %v381
    %v498 = vunpack.c.l.b16 %v382
    %v499 = vunpack.c.l.b16 %v383
    %v500 = vunpack.c.l.b16 %v384
    %v501 = vunpack.c.l.b16 %v385
    %v502 = vunpack.c.l.b16 %v386
    %v503 = vunpack.c.l.b16 %v387
    %v504 = vunpack.c.l.b16 %v388
    %v505 = vunpack.c.l.b16 %v389
    %v506 = vunpack.c.l.b16 %v390
    %v507 = vunpack.c.l.b16 %v391
    %v508 = vunpack.c.l.b16 %v392
    %v509 = vunpack.c.l.b16 %v393
    %v510 = vunpack.c.l.b16 %v394
    %v511 = vunpack.c.l.b16 %v395
    %v512 = vunpack.c.l.b16 %v396
    %v513 = vunpack.c.l.b16 %v397
    %v514 = vunpack.c.l.b16 %v398
    %v515 = vpack.c.b16 %v484, %v483
    %v516 = vpack.c.b16 %v486, %v485
    %v517 = vpack.c.b16 %v488, %v487
    %v518 = vpack.c.b16 %v490, %v489
    %v519 = vpack.c.b16 %v492, %v491
    %v520 = vpack.c.b16 %v494, %v493
    %v521 = vpack.c.b16 %v496, %v495
    %v522 = vpack.c.b16 %v498, %v497
    %v523 = vpack.c.b16 %v500, %v499
    %v524 = vpack.c.b16 %v502, %v501
    %v525 = vpack.c.b16 %v504, %v503
    %v526 = vpack.c.b16 %v506, %v505
    %v527 = vpack.c.b16 %v508, %v507
    %v528 = vpack.c.b16 %v510, %v509
    %v529 = vpack.c.b16 %v512, %v511
    %v530 = vpack.c.b16 %v514, %v513
    %547 = vmatprep.subr.bf16.mxu0 0
    %548 = vmatpush1.bf16.msra.mxu0 %v515
    %549 = vmatprep.subr.bf16.mxu0 0
    %550 = vmatpush1.bf16.msra.mxu0 %v516
    %551 = vmatprep.subr.bf16.mxu0 0
    %552 = vmatpush1.bf16.msra.mxu0 %v517
    %553 = vmatprep.subr.bf16.mxu0 0
    %554 = vmatpush1.bf16.msra.mxu0 %v518
    %555 = vmatprep.subr.bf16.mxu0 0
    %556 = vmatpush1.bf16.msra.mxu0 %v519
    %557 = vmatprep.subr.bf16.mxu0 0
    %558 = vmatpush1.bf16.msra.mxu0 %v520
    %559 = vmatprep.subr.bf16.mxu0 0
    %560 = vmatpush1.bf16.msra.mxu0 %v521
    %561 = vmatprep.subr.bf16.mxu0 0
    %562 = vmatpush1.bf16.msra.mxu0 %v522
    %563 = vmatprep.subr.bf16.mxu0 0
    %564 = vmatpush1.bf16.msra.mxu0 %v523
    %565 = vmatprep.subr.bf16.mxu0 0
    %566 = vmatpush1.bf16.msra.mxu0 %v524
    %567 = vmatprep.subr.bf16.mxu0 0
    %568 = vmatpush1.bf16.msra.mxu0 %v525
    %569 = vmatprep.subr.bf16.mxu0 0
    %570 = vmatpush1.bf16.msra.mxu0 %v526
    %571 = vmatprep.subr.bf16.mxu0 0
    %572 = vmatpush1.bf16.msra.mxu0 %v527
    %573 = vmatprep.subr.bf16.mxu0 0
    %574 = vmatpush1.bf16.msra.mxu0 %v528
    %575 = vmatprep.subr.bf16.mxu0 0
    %576 = vmatpush1.bf16.msra.mxu0 %v529
    %577 = vmatprep.subr.bf16.mxu0 0
    %578 = vmatpush1.bf16.msra.mxu0 %v530
    %579 = vmatprep.mubr.bf16.mxu0 %v366
    %580 = vmatmul.mubr.bf16.gmra.mrb[0].mxu0 %v365
    %v581 = vpop.f32.mrb[0].mxu0
    %v582 = vadd.f32 %v446, %v581
    %v583 = vpop.f32.mrb[0].mxu0
    %v584 = vpop.f32.mrb[0].mxu0
    %v585 = vpop.f32.mrb[0].mxu0
    %586 = vdwg.mxu0
    %v587 = vld [vmem:[%s6] sm:$0x1]
    %v589 = vlaneseq
    %v590 = vshrl.u32 %v589, 7
    %v591 = vsub.s32 0, %v590
    %v592 = vrot.slane %v587, %v591
    %v594 = vadd.f32 %v582, %v592
    %v595 = vtanh.pop %v594
    %v596 = vadd.f32 %v595, 1.0
    %v597 = vmul.f32 %v596, 3.5
    %v598 = vadd.f32 %v597, -5.0
    %v599 = vlaneseq
    %v600 = vand.u32 %v599, 127
    %vm601 = vcmp.lt.s32.totalorder %v600, 6
    %v602 = vsel %vm601, %v594, %v598
    %vm603 = vcmask 97280
    %604 = vst.msk [vmem:[#allocation5] sm:$0xff] %vm603, %v602
    // Predicated region
    $region38: #{tpu_custom_call.1} parent=1 // pred_check
      _
    $region39: #{tpu_custom_call.1} parent=1 // pred_check_branch
      %606 = sbr.rel (0) target = $region41
    $region40: #{tpu_custom_call.1} parent=1 // pred_region
      %s608 = ssub.s32 128, 128
      %609 = vsyncadd [#allocation4], %s608
      %s611 = sshll.u32 [#allocation5], 4
      %s612 = int_to_ptr.vmem [resolvable:$true] %s611
      %614 = dma.vmem_to_hbm [thread:$0]  %s612, 128, %s8, [#allocation4]
    $region41: #{tpu_custom_call.1} parent=1 // pred_fallthru
      _
    // Predicated region
    $region42: #{tpu_custom_call.1} parent=1 // pred_check
      _
    $region43: #{tpu_custom_call.1} parent=1 // pred_check_branch
      %616 = sbr.rel (0) target = $region45
    $region44: #{tpu_custom_call.1} parent=1 // pred_region
      %617 = dma.done [#allocation4], 128
    $region45: #{tpu_custom_call.1} parent=1 // pred_fallthru
      _
    %618 = vsyncpa [#allocation3], 1
    %619 = vsyncpa [#allocation4], 1

</llo_original>
